<compile_context>
chip_gen: v5e
topology: v5e:2x2
jax: 0.10.0
libtpu: 0.0.40
codegen_flags: <defaults>
</compile_context>

<pallas_src>
import jax
import jax.numpy as jnp
from jax.experimental import pallas as pl
from jax.experimental.pallas import tpu as pltpu

EPS = 1e-5
LANE = 128


def _round_up(n, m):
    return (n + m - 1) // m * m


def _bn(x, gamma, beta, mean, var):
    return (x - mean) * jax.lax.rsqrt(var + EPS) * gamma + beta


# ---------------------------------------------------------------------------
# Kernel
# ---------------------------------------------------------------------------
def _make_kernel(pack_out: bool, nch: int):
    """Builds the fused forward kernel.

    vec_ref rows (f32, width = hidden_pad):
      0: bd   -- downsampling bias with bn1 folded in
      1: ra1  -- res_block.bn1 scale   (gamma * rsqrt(var + eps))
      2: rc1  -- res_block.bn1 shift   (beta - mean * scale)
      3: rb1  -- linear1 bias with res_block.bn2 folded in
      4: rb2  -- linear2 bias
      5: bf   -- final_layer bias (real value in column 0)
    """

    def kernel(x_ref, wd_ref, rw1_ref, rw2_ref, wf_ref, vec_ref, o_ref):
        cdt = wd_ref.dtype                       # matmul operand dtype (f32/bf16)
        out_w = wf_ref.shape[1]                  # 128 (padded final projection)

        bd = vec_ref[0:1, :]
        ra1 = vec_ref[1:2, :]
        rc1 = vec_ref[2:3, :]
        rb1 = vec_ref[3:4, :]
        rb2 = vec_ref[4:5, :]
        bf = vec_ref[5:6, :out_w]

        x = x_ref[...].astype(cdt)               # cast fused into the kernel

        # downsampling_linear + bn1 (folded) + relu  (dropout == identity at eval)
        h = jnp.dot(x, wd_ref[...], preferred_element_type=jnp.float32) + bd
        h = jnp.maximum(h, 0.0)

        # ResidualBlock
        residual = h
        out = h * ra1 + rc1                      # res_block.bn1 (scale/shift only)
        out = jnp.maximum(out, 0.0)
        out = jnp.dot(out.astype(cdt), rw1_ref[...],
                      preferred_element_type=jnp.float32) + rb1   # linear1 (+bn2)
        out = jnp.maximum(out, 0.0)              # relu (dropout == identity)
        out = jnp.dot(out.astype(cdt), rw2_ref[...],
                      preferred_element_type=jnp.float32) + rb2   # linear2
        out = out + residual

        # final_layer: hidden -> 1, computed as a 128-wide padded matmul so the
        # MXU result is lane-aligned; only column 0 is real.  (Kept on the MXU
        # while the kernel is HBM-bound; a VPU mul + XLU reduce would free MXU
        # cycles if it ever becomes MXU-bound at very large hidden dims.)
        y = jnp.dot(out.astype(cdt), wf_ref[...],
                    preferred_element_type=jnp.float32) + bf

        if pack_out:
            # Lane-pack column 0: for every 128-row chunk an XLU transpose of
            # the (128,128) result puts the real column into lanes; the output
            # block is a dense (nch, 128) slab -> ~128x less HBM writeback.
            rows = []
            for j in range(nch):
                blk = y[j * 128:(j + 1) * 128, :]          # (128, 128)
                rows.append(blk.T[0:1, :])                 # column 0 -> lanes
            packed = rows[0] if nch == 1 else jnp.concatenate(rows, axis=0)
            o_ref[...] = packed.astype(o_ref.dtype)
        else:
            o_ref[...] = y.astype(o_ref.dtype)

    return kernel


# ---------------------------------------------------------------------------
# One-time parameter preparation (hoisted out of the per-call path)
# ---------------------------------------------------------------------------
def _bn_scale_shift(g, b, m, v):
    a = g * jax.lax.rsqrt(v + EPS)
    return a, b - m * a


def prepare_classifier_params(params, compute_dtype=jnp.bfloat16):
    """Fold eval-mode BatchNorms, pad to lane-aligned shapes, cast weights.

    Call once per parameter set (static for inference) and reuse across
    classifier_apply calls: per-call HBM traffic is then just x and the packed
    output.
    """
    D_in, H = params["wd"].shape
    H_pad = _round_up(H, LANE)
    OUT_PAD = LANE

    a1, c1 = _bn_scale_shift(params["g1"], params["be1"], params["m1"], params["v1"])
    ra1, rc1 = _bn_scale_shift(params["rg1"], params["rbe1"], params["rm1"], params["rv1"])
    a2, c2 = _bn_scale_shift(params["rg2"], params["rbe2"], params["rm2"], params["rv2"])

    wd = params["wd"] * a1                       # bn1 folded into downsampling_linear
    bd = params["bd"] * a1 + c1
    rw1 = params["rw1"] * a2                     # res_block.bn2 folded into linear1
    rb1 = params["rb1"] * a2 + c2
    rw2, rb2 = params["rw2"], params["rb2"]
    wf, bf = params["wf"], params["bf"]
    # NOTE: res_block.bn1 (ra1, rc1) is NOT folded across the preceding ReLU.

    def pad2(w, r, c):
        return jnp.pad(w, ((0, r - w.shape[0]), (0, c - w.shape[1])))

    wd_p = pad2(wd, D_in, H_pad).astype(compute_dtype)     # (D_in, H_pad): no K pad
    rw1_p = pad2(rw1, H_pad, H_pad).astype(compute_dtype)
    rw2_p = pad2(rw2, H_pad, H_pad).astype(compute_dtype)
    wf_p = pad2(wf, H_pad, OUT_PAD).astype(compute_dtype)  # (H_pad, 128)

    def pad_row(v, n):
        v = v.reshape(1, -1)
        return jnp.pad(v, ((0, 0), (0, n - v.shape[1])))

    vec = jnp.concatenate(
        [pad_row(bd, H_pad), pad_row(ra1, H_pad), pad_row(rc1, H_pad),
         pad_row(rb1, H_pad), pad_row(rb2, H_pad), pad_row(bf, H_pad)],
        axis=0)
    vec = jnp.pad(vec, ((0, 8 - vec.shape[0]), (0, 0))).astype(jnp.float32)

    return {"wd": wd_p, "rw1": rw1_p, "rw2": rw2_p, "wf": wf_p, "vec": vec}


# ---------------------------------------------------------------------------
# Tiling / VMEM heuristics
# ---------------------------------------------------------------------------
def _tpu_topology():
    """(vmem_capacity_bytes, tensorcores_per_chip) with safe fallbacks."""
    vmem_cap, n_tc = 64 * 2**20, 1               # conservative (v7x per-TC) defaults
    try:
        info = pltpu.get_tpu_info()
        cap = int(getattr(info, "vmem_capacity_bytes", 0) or 0)
        if cap > 0:
            vmem_cap = cap
        for name in ("num_cores", "core_count", "tensorcore_count"):
            v = getattr(info, name, None)
            if v:
                n_tc = max(1, min(2, int(v)))
                break
    except Exception:
        pass
    if n_tc == 1:
        try:
            kind = jax.devices()[0].device_kind.lower()
            if "v7" in kind or "7x" in kind:
                n_tc = 2
        except Exception:
            pass
    return vmem_cap, n_tc


def _vmem_estimate(bt, d_in, h_pad, out_block_elems, x_isz, w_isz, weight_bufs):
    weights = (d_in * h_pad + 2 * h_pad * h_pad + h_pad * LANE) * w_isz + 8 * h_pad * 4
    streamed = 2 * bt * d_in * x_isz + 2 * out_block_elems * 4     # double-buffered IO
    interm = bt * (d_in * w_isz + 4 * h_pad * 4 + 2 * LANE * 4)     # in-kernel temporaries
    return weight_bufs * weights + streamed + interm


def _choose_batch_tile(B, batch_tile, n_tc, budget, d_in, h_pad, x_isz, w_isz,
                       weight_bufs):
    if B >= LANE:
        align = LANE                              # lane-packed output path
        bt = min(_round_up(batch_tile, align), _round_up(B, align))
        # 2-TC chips (v7x): aim for >= 2 grid steps per core so the x DMA is
        # hidden behind compute on each core.  1-TC chips are not split.
        if n_tc > 1:
            want_steps = 2 * n_tc
            if B >= want_steps * align:
                bt = min(bt, _round_up(pl.cdiv(B, want_steps), align))
    else:
        align = 8
        bt = B if B < align else _round_up(B, align)   # single grid step
    # Shrink until the VMEM budget is met (weights stay fully resident).
    while bt > align:
        out_elems = bt if (bt % LANE == 0 and bt >= LANE) else bt * LANE
        if _vmem_estimate(bt, d_in, h_pad, out_elems, x_isz, w_isz,
                          weight_bufs) <= budget:
            break
        bt = max(align, _round_up(bt // 2, align))
    return bt


# ---------------------------------------------------------------------------
# Forward pass
# ---------------------------------------------------------------------------
def classifier_apply(x, prepared, *, batch_tile=1024):
    """Fused eval-mode forward. `prepared` comes from prepare_classifier_params."""
    B, D_in = x.shape
    wd_p, rw1_p = prepared["wd"], prepared["rw1"]
    rw2_p, wf_p, vec = prepared["rw2"], prepared["wf"], prepared["vec"]
    assert wd_p.shape[0] == D_in, "input feature dim mismatch with prepared params"
    H_pad = wd_p.shape[1]

    x_isz = jnp.dtype(x.dtype).itemsize
    w_isz = jnp.dtype(wd_p.dtype).itemsize
    vmem_cap, n_tc = _tpu_topology()
    budget = int(0.85 * vmem_cap)                 # leave headroom for Mosaic scratch

    def attempt(weight_bufs):
        bt = _choose_batch_tile(B, batch_tile, n_tc, budget, D_in, H_pad,
                                x_isz, w_isz, weight_bufs)
        pack_out = (bt % LANE == 0) and bt >= LANE
        nch = bt // LANE if pack_out else 0
        grid = (pl.cdiv(B, bt),)

        def resident(shape):
            idx = lambda i: (0,) * len(shape)
            if weight_bufs == 1:
                return pl.BlockSpec(shape, idx, pipeline_mode=pl.Buffered(1))
            return pl.BlockSpec(shape, idx)

        in_specs = [
            pl.BlockSpec((bt, D_in), lambda i: (i, 0)),      # x (streamed, unpadded)
            resident((D_in, H_pad)),                         # wd (resident)
            resident((H_pad, H_pad)),                        # rw1
            resident((H_pad, H_pad)),                        # rw2
            resident((H_pad, LANE)),                         # wf (128-wide)
            resident((8, H_pad)),                            # packed bias/scale rows
        ]
        if pack_out:
            out_shape = jax.ShapeDtypeStruct((grid[0], nch, LANE), jnp.float32)
            out_spec = pl.BlockSpec((None, nch, LANE), lambda i: (i, 0, 0))
            out_elems = nch * LANE
        else:
            out_shape = jax.ShapeDtypeStruct((B, LANE), jnp.float32)
            out_spec = pl.BlockSpec((bt, LANE), lambda i: (i, 0))
            out_elems = bt * LANE

        est = _vmem_estimate(bt, D_in, H_pad, out_elems, x_isz, w_isz, weight_bufs)
        vmem_limit = int(min(budget, max(int(1.4 * est), 32 * 2**20)))

        out = pl.pallas_call(
            _make_kernel(pack_out, nch),
            out_shape=out_shape,
            grid_spec=pltpu.PrefetchScalarGridSpec(
                num_scalar_prefetch=0,
                grid=grid,
                in_specs=in_specs,
                out_specs=out_spec,
            ),
            compiler_params=pltpu.CompilerParams(
                dimension_semantics=("parallel",),
                vmem_limit_bytes=vmem_limit,
            ),
        )(x, wd_p, rw1_p, rw2_p, wf_p, vec)

        if pack_out:
            return out.reshape(-1)[:B].reshape(B, 1)
        return out[:, :1]

    try:
        return attempt(1)     # single-buffered resident weights (preferred)
    except Exception:
        return attempt(2)     # fall back to default double buffering


# ---------------------------------------------------------------------------
# Parameters (shapes match the PyTorch module) + pure-JAX reference
# ---------------------------------------------------------------------------
def init_params(key, input_dim, hidden_dim):
    ks = jax.random.split(key, 8)

    def linear(k, fan_in, fan_out):
        bound = 1.0 / jnp.sqrt(fan_in)
        kw, kb = jax.random.split(k)
        w = jax.random.uniform(kw, (fan_in, fan_out), jnp.float32, -bound, bound)
        b = jax.random.uniform(kb, (1, fan_out), jnp.float32, -bound, bound)
        return w, b

    wd, bd = linear(ks[0], input_dim, hidden_dim)      # downsampling_linear
    rw1, rb1 = linear(ks[1], hidden_dim, hidden_dim)   # res_block1.linear1
    rw2, rb2 = linear(ks[2], hidden_dim, hidden_dim)   # res_block1.linear2
    wf, bf = linear(ks[3], hidden_dim, 1)              # final_layer

    def bn(k, dim):
        kg, kb = jax.random.split(k)
        gamma = 1.0 + 0.1 * jax.random.normal(kg, (1, dim), jnp.float32)
        beta = 0.1 * jax.random.normal(kb, (1, dim), jnp.float32)
        mean = jnp.zeros((1, dim), jnp.float32)
        var = jnp.ones((1, dim), jnp.float32)
        return gamma, beta, mean, var

    g1, be1, m1, v1 = bn(ks[4], hidden_dim)            # bn1
    rg1, rbe1, rm1, rv1 = bn(ks[5], hidden_dim)        # res_block1.bn1
    rg2, rbe2, rm2, rv2 = bn(ks[6], hidden_dim)        # res_block1.bn2

    return dict(
        wd=wd, bd=bd,
        g1=g1, be1=be1, m1=m1, v1=v1,
        rg1=rg1, rbe1=rbe1, rm1=rm1, rv1=rv1,
        rw1=rw1, rb1=rb1,
        rg2=rg2, rbe2=rbe2, rm2=rm2, rv2=rv2,
        rw2=rw2, rb2=rb2,
        wf=wf, bf=bf,
    )


def classifier_reference(x, p):
    """Pure-JAX reference (eval-mode, unfolded) for correctness checking."""
    h = x @ p["wd"] + p["bd"]
    h = _bn(h, p["g1"], p["be1"], p["m1"], p["v1"])
    h = jnp.maximum(h, 0.0)
    res = h
    out = _bn(h, p["rg1"], p["rbe1"], p["rm1"], p["rv1"])
    out = jnp.maximum(out, 0.0)
    out = out @ p["rw1"] + p["rb1"]
    out = _bn(out, p["rg2"], p["rbe2"], p["rm2"], p["rv2"])
    out = jnp.maximum(out, 0.0)
    out = out @ p["rw2"] + p["rb2"]
    out = out + res
    return out @ p["wf"] + p["bf"]


if __name__ == "__main__":
    key = jax.random.PRNGKey(0)
    k_x, k_p, k_x2, k_p2 = jax.random.split(key, 4)

    # --- small-shape check (tiny sizes, padded-output fallback path) --------
    B, INPUT_DIM, HIDDEN_DIM = 8, 64, 32
    x = jax.random.normal(k_x, (B, INPUT_DIM), jnp.float32)
    params = init_params(k_p, INPUT_DIM, HIDDEN_DIM)
    y_ref = classifier_reference(x, params)

    prep_f32 = prepare_classifier_params(params, compute_dtype=jnp.float32)
    y = jax.block_until_ready(classifier_apply(x, prep_f32))
    assert y.shape == (B, 1)
    assert jnp.allclose(y, y_ref, atol=1e-4, rtol=1e-4), "f32 mismatch vs reference"

    prep_bf16 = prepare_classifier_params(params)        # default bfloat16 fast path
    y_bf16 = jax.block_until_ready(classifier_apply(x, prep_bf16))
    assert jnp.allclose(y_bf16, y_ref, atol=1e-1, rtol=1e-1), "bf16 mismatch vs reference"

    # --- larger check: multi-step grid, partial last block, lane-packed out --
    B2, D2, H2 = 300, 200, 96
    x2 = jax.random.normal(k_x2, (B2, D2), jnp.float32)
    params2 = init_params(k_p2, D2, H2)
    y2_ref = classifier_reference(x2, params2)
    prep2 = prepare_classifier_params(params2)            # bfloat16
    y2 = jax.block_until_ready(classifier_apply(x2, prep2, batch_tile=128))
    assert y2.shape == (B2, 1)
    assert jnp.allclose(y2, y2_ref, atol=1e-1, rtol=1e-1), "packed-output mismatch vs reference"

    print("KERNEL_OK")
</pallas_src>

<mosaic_0001>
module attributes {stable_mosaic.version = 11 : i64} {
  func.func @kernel(%arg0: i32, %arg1: memref<8x64xf32, #tpu.memory_space<vmem>>, %arg2: memref<64x128xf32, #tpu.memory_space<vmem>>, %arg3: memref<128x128xf32, #tpu.memory_space<vmem>>, %arg4: memref<128x128xf32, #tpu.memory_space<vmem>>, %arg5: memref<128x128xf32, #tpu.memory_space<vmem>>, %arg6: memref<8x128xf32, #tpu.memory_space<vmem>>, %arg7: memref<8x128xf32, #tpu.memory_space<vmem>>) attributes {dimension_semantics = [#tpu.dimension_semantics<parallel>], iteration_bounds = array<i64: 1>, scalar_prefetch = 0 : i64, scratch_operands = 0 : i64, tpu.core_type = #tpu.core_type<tc>, window_params = [{transform_indices = @transform_0, window_bounds = array<i64: 8, 64>}, {pipeline_mode = #tpu.pipeline_mode<synchronous>, transform_indices = @transform_1, window_bounds = array<i64: 64, 128>}, {pipeline_mode = #tpu.pipeline_mode<synchronous>, transform_indices = @transform_2, window_bounds = array<i64: 128, 128>}, {pipeline_mode = #tpu.pipeline_mode<synchronous>, transform_indices = @transform_3, window_bounds = array<i64: 128, 128>}, {pipeline_mode = #tpu.pipeline_mode<synchronous>, transform_indices = @transform_4, window_bounds = array<i64: 128, 128>}, {pipeline_mode = #tpu.pipeline_mode<synchronous>, transform_indices = @transform_5, window_bounds = array<i64: 8, 128>}, {transform_indices = @transform_6, window_bounds = array<i64: 8, 128>}]} {
    %c0 = arith.constant 0 : index
    %c0_0 = arith.constant 0 : index
    %0 = vector.load %arg6[%c0, %c0_0] : memref<8x128xf32, #tpu.memory_space<vmem>>, vector<1x128xf32>
    %c1 = arith.constant 1 : index
    %c0_1 = arith.constant 0 : index
    %1 = vector.load %arg6[%c1, %c0_1] : memref<8x128xf32, #tpu.memory_space<vmem>>, vector<1x128xf32>
    %c2 = arith.constant 2 : index
    %c0_2 = arith.constant 0 : index
    %2 = vector.load %arg6[%c2, %c0_2] : memref<8x128xf32, #tpu.memory_space<vmem>>, vector<1x128xf32>
    %c3 = arith.constant 3 : index
    %c0_3 = arith.constant 0 : index
    %3 = vector.load %arg6[%c3, %c0_3] : memref<8x128xf32, #tpu.memory_space<vmem>>, vector<1x128xf32>
    %c4 = arith.constant 4 : index
    %c0_4 = arith.constant 0 : index
    %4 = vector.load %arg6[%c4, %c0_4] : memref<8x128xf32, #tpu.memory_space<vmem>>, vector<1x128xf32>
    %c5 = arith.constant 5 : index
    %c0_5 = arith.constant 0 : index
    %5 = vector.load %arg6[%c5, %c0_5] : memref<8x128xf32, #tpu.memory_space<vmem>>, vector<1x128xf32>
    %c0_6 = arith.constant 0 : index
    %c0_7 = arith.constant 0 : index
    %6 = vector.load %arg1[%c0_6, %c0_7] : memref<8x64xf32, #tpu.memory_space<vmem>>, vector<8x64xf32>
    %c0_8 = arith.constant 0 : index
    %c0_9 = arith.constant 0 : index
    %7 = vector.load %arg2[%c0_8, %c0_9] : memref<64x128xf32, #tpu.memory_space<vmem>>, vector<64x128xf32>
    %cst = arith.constant dense<0.000000e+00> : vector<8x128xf32>
    %8 = tpu.matmul %6, %7, %cst {dimension_numbers = #tpu.dot_dimension_numbers<[1], [0], [0], [1], [0, 0, 1, 1], [], []>} : vector<8x64xf32>, vector<64x128xf32>, vector<8x128xf32> -> vector<8x128xf32>
    %9 = vector.broadcast %0 : vector<1x128xf32> to vector<8x128xf32>
    %10 = arith.addf %8, %9 : vector<8x128xf32>
    %cst_10 = arith.constant 0.000000e+00 : f32
    %11 = vector.broadcast %cst_10 : f32 to vector<8x128xf32>
    %12 = arith.maximumf %10, %11 : vector<8x128xf32>
    %13 = vector.broadcast %1 : vector<1x128xf32> to vector<8x128xf32>
    %14 = arith.mulf %12, %13 : vector<8x128xf32>
    %15 = vector.broadcast %2 : vector<1x128xf32> to vector<8x128xf32>
    %16 = arith.addf %14, %15 : vector<8x128xf32>
    %cst_11 = arith.constant 0.000000e+00 : f32
    %17 = vector.broadcast %cst_11 : f32 to vector<8x128xf32>
    %18 = arith.maximumf %16, %17 : vector<8x128xf32>
    %c0_12 = arith.constant 0 : index
    %c0_13 = arith.constant 0 : index
    %19 = vector.load %arg3[%c0_12, %c0_13] : memref<128x128xf32, #tpu.memory_space<vmem>>, vector<128x128xf32>
    %cst_14 = arith.constant dense<0.000000e+00> : vector<8x128xf32>
    %20 = tpu.matmul %18, %19, %cst_14 {dimension_numbers = #tpu.dot_dimension_numbers<[1], [0], [0], [1], [0, 0, 1, 1], [], []>} : vector<8x128xf32>, vector<128x128xf32>, vector<8x128xf32> -> vector<8x128xf32>
    %21 = vector.broadcast %3 : vector<1x128xf32> to vector<8x128xf32>
    %22 = arith.addf %20, %21 : vector<8x128xf32>
    %cst_15 = arith.constant 0.000000e+00 : f32
    %23 = vector.broadcast %cst_15 : f32 to vector<8x128xf32>
    %24 = arith.maximumf %22, %23 : vector<8x128xf32>
    %c0_16 = arith.constant 0 : index
    %c0_17 = arith.constant 0 : index
    %25 = vector.load %arg4[%c0_16, %c0_17] : memref<128x128xf32, #tpu.memory_space<vmem>>, vector<128x128xf32>
    %cst_18 = arith.constant dense<0.000000e+00> : vector<8x128xf32>
    %26 = tpu.matmul %24, %25, %cst_18 {dimension_numbers = #tpu.dot_dimension_numbers<[1], [0], [0], [1], [0, 0, 1, 1], [], []>} : vector<8x128xf32>, vector<128x128xf32>, vector<8x128xf32> -> vector<8x128xf32>
    %27 = vector.broadcast %4 : vector<1x128xf32> to vector<8x128xf32>
    %28 = arith.addf %26, %27 : vector<8x128xf32>
    %29 = arith.addf %28, %12 : vector<8x128xf32>
    %c0_19 = arith.constant 0 : index
    %c0_20 = arith.constant 0 : index
    %30 = vector.load %arg5[%c0_19, %c0_20] : memref<128x128xf32, #tpu.memory_space<vmem>>, vector<128x128xf32>
    %cst_21 = arith.constant dense<0.000000e+00> : vector<8x128xf32>
    %31 = tpu.matmul %29, %30, %cst_21 {dimension_numbers = #tpu.dot_dimension_numbers<[1], [0], [0], [1], [0, 0, 1, 1], [], []>} : vector<8x128xf32>, vector<128x128xf32>, vector<8x128xf32> -> vector<8x128xf32>
    %32 = vector.broadcast %5 : vector<1x128xf32> to vector<8x128xf32>
    %33 = arith.addf %31, %32 : vector<8x128xf32>
    %c0_22 = arith.constant 0 : index
    %c0_23 = arith.constant 0 : index
    %34 = vector.load %arg7[%c0_22, %c0_23] : memref<8x128xf32, #tpu.memory_space<vmem>>, vector<8x128xf32>
    tpu.vector_store %arg7[%c0_22, %c0_23], %33 {strides = array<i32>} : memref<8x128xf32, #tpu.memory_space<vmem>>, vector<8x128xf32>,
    return
  }
  func.func @transform_0(%arg0: i32) -> (i32, i32) {
    %c0_i32 = arith.constant 0 : i32
    %c0_i32_0 = arith.constant 0 : i32
    return %arg0, %c0_i32 : i32, i32
  }
  func.func @transform_1(%arg0: i32) -> (i32, i32) {
    %c0_i32 = arith.constant 0 : i32
    %c0_i32_0 = arith.constant 0 : i32
    %c0_i32_1 = arith.constant 0 : i32
    return %c0_i32, %c0_i32_0 : i32, i32
  }
  func.func @transform_2(%arg0: i32) -> (i32, i32) {
    %c0_i32 = arith.constant 0 : i32
    %c0_i32_0 = arith.constant 0 : i32
    %c0_i32_1 = arith.constant 0 : i32
    return %c0_i32, %c0_i32_0 : i32, i32
  }
  func.func @transform_3(%arg0: i32) -> (i32, i32) {
    %c0_i32 = arith.constant 0 : i32
    %c0_i32_0 = arith.constant 0 : i32
    %c0_i32_1 = arith.constant 0 : i32
    return %c0_i32, %c0_i32_0 : i32, i32
  }
  func.func @transform_4(%arg0: i32) -> (i32, i32) {
    %c0_i32 = arith.constant 0 : i32
    %c0_i32_0 = arith.constant 0 : i32
    %c0_i32_1 = arith.constant 0 : i32
    return %c0_i32, %c0_i32_0 : i32, i32
  }
  func.func @transform_5(%arg0: i32) -> (i32, i32) {
    %c0_i32 = arith.constant 0 : i32
    %c0_i32_0 = arith.constant 0 : i32
    %c0_i32_1 = arith.constant 0 : i32
    return %c0_i32, %c0_i32_0 : i32, i32
  }
  func.func @transform_6(%arg0: i32) -> (i32, i32) {
    %c0_i32 = arith.constant 0 : i32
    %c0_i32_0 = arith.constant 0 : i32
    return %arg0, %c0_i32 : i32, i32
  }
}

module attributes {stable_mosaic.version = 11 : i64} {
  func.func @kernel(%arg0: i32, %arg1: memref<8x64xf32, #tpu.memory_space<vmem>>, %arg2: memref<64x128xf32, #tpu.memory_space<vmem>>, %arg3: memref<128x128xf32, #tpu.memory_space<vmem>>, %arg4: memref<128x128xf32, #tpu.memory_space<vmem>>, %arg5: memref<128x128xf32, #tpu.memory_space<vmem>>, %arg6: memref<8x128xf32, #tpu.memory_space<vmem>>, %arg7: memref<8x128xf32, #tpu.memory_space<vmem>>) attributes {dimension_semantics = [#tpu.dimension_semantics<parallel>], iteration_bounds = array<i64: 1>, scalar_prefetch = 0 : i64, scratch_operands = 0 : i64, tpu.core_type = #tpu.core_type<tc>, window_params = [{transform_indices = @transform_0, window_bounds = array<i64: 8, 64>}, {pipeline_mode = #tpu.pipeline_mode<synchronous>, transform_indices = @transform_1, window_bounds = array<i64: 64, 128>}, {pipeline_mode = #tpu.pipeline_mode<synchronous>, transform_indices = @transform_2, window_bounds = array<i64: 128, 128>}, {pipeline_mode = #tpu.pipeline_mode<synchronous>, transform_indices = @transform_3, window_bounds = array<i64: 128, 128>}, {pipeline_mode = #tpu.pipeline_mode<synchronous>, transform_indices = @transform_4, window_bounds = array<i64: 128, 128>}, {pipeline_mode = #tpu.pipeline_mode<synchronous>, transform_indices = @transform_5, window_bounds = array<i64: 8, 128>}, {transform_indices = @transform_6, window_bounds = array<i64: 8, 128>}]} {
    %c0 = arith.constant 0 : index
    %c0_0 = arith.constant 0 : index
    %0 = vector.load %arg6[%c0, %c0_0] : memref<8x128xf32, #tpu.memory_space<vmem>>, vector<1x128xf32>
    %c1 = arith.constant 1 : index
    %c0_1 = arith.constant 0 : index
    %1 = vector.load %arg6[%c1, %c0_1] : memref<8x128xf32, #tpu.memory_space<vmem>>, vector<1x128xf32>
    %c2 = arith.constant 2 : index
    %c0_2 = arith.constant 0 : index
    %2 = vector.load %arg6[%c2, %c0_2] : memref<8x128xf32, #tpu.memory_space<vmem>>, vector<1x128xf32>
    %c3 = arith.constant 3 : index
    %c0_3 = arith.constant 0 : index
    %3 = vector.load %arg6[%c3, %c0_3] : memref<8x128xf32, #tpu.memory_space<vmem>>, vector<1x128xf32>
    %c4 = arith.constant 4 : index
    %c0_4 = arith.constant 0 : index
    %4 = vector.load %arg6[%c4, %c0_4] : memref<8x128xf32, #tpu.memory_space<vmem>>, vector<1x128xf32>
    %c5 = arith.constant 5 : index
    %c0_5 = arith.constant 0 : index
    %5 = vector.load %arg6[%c5, %c0_5] : memref<8x128xf32, #tpu.memory_space<vmem>>, vector<1x128xf32>
    %c0_6 = arith.constant 0 : index
    %c0_7 = arith.constant 0 : index
    %6 = vector.load %arg1[%c0_6, %c0_7] : memref<8x64xf32, #tpu.memory_space<vmem>>, vector<8x64xf32>
    %c0_8 = arith.constant 0 : index
    %c0_9 = arith.constant 0 : index
    %7 = vector.load %arg2[%c0_8, %c0_9] : memref<64x128xf32, #tpu.memory_space<vmem>>, vector<64x128xf32>
    %cst = arith.constant dense<0.000000e+00> : vector<8x128xf32>
    %8 = tpu.matmul %6, %7, %cst {dimension_numbers = #tpu.dot_dimension_numbers<[1], [0], [0], [1], [0, 0, 1, 1], [], []>} : vector<8x64xf32>, vector<64x128xf32>, vector<8x128xf32> -> vector<8x128xf32>
    %9 = vector.broadcast %0 : vector<1x128xf32> to vector<8x128xf32>
    %10 = arith.addf %8, %9 : vector<8x128xf32>
    %cst_10 = arith.constant 0.000000e+00 : f32
    %11 = vector.broadcast %cst_10 : f32 to vector<8x128xf32>
    %12 = arith.maximumf %10, %11 : vector<8x128xf32>
    %13 = vector.broadcast %1 : vector<1x128xf32> to vector<8x128xf32>
    %14 = arith.mulf %12, %13 : vector<8x128xf32>
    %15 = vector.broadcast %2 : vector<1x128xf32> to vector<8x128xf32>
    %16 = arith.addf %14, %15 : vector<8x128xf32>
    %cst_11 = arith.constant 0.000000e+00 : f32
    %17 = vector.broadcast %cst_11 : f32 to vector<8x128xf32>
    %18 = arith.maximumf %16, %17 : vector<8x128xf32>
    %c0_12 = arith.constant 0 : index
    %c0_13 = arith.constant 0 : index
    %19 = vector.load %arg3[%c0_12, %c0_13] : memref<128x128xf32, #tpu.memory_space<vmem>>, vector<128x128xf32>
    %cst_14 = arith.constant dense<0.000000e+00> : vector<8x128xf32>
    %20 = tpu.matmul %18, %19, %cst_14 {dimension_numbers = #tpu.dot_dimension_numbers<[1], [0], [0], [1], [0, 0, 1, 1], [], []>} : vector<8x128xf32>, vector<128x128xf32>, vector<8x128xf32> -> vector<8x128xf32>
    %21 = vector.broadcast %3 : vector<1x128xf32> to vector<8x128xf32>
    %22 = arith.addf %20, %21 : vector<8x128xf32>
    %cst_15 = arith.constant 0.000000e+00 : f32
    %23 = vector.broadcast %cst_15 : f32 to vector<8x128xf32>
    %24 = arith.maximumf %22, %23 : vector<8x128xf32>
    %c0_16 = arith.constant 0 : index
    %c0_17 = arith.constant 0 : index
    %25 = vector.load %arg4[%c0_16, %c0_17] : memref<128x128xf32, #tpu.memory_space<vmem>>, vector<128x128xf32>
    %cst_18 = arith.constant dense<0.000000e+00> : vector<8x128xf32>
    %26 = tpu.matmul %24, %25, %cst_18 {dimension_numbers = #tpu.dot_dimension_numbers<[1], [0], [0], [1], [0, 0, 1, 1], [], []>} : vector<8x128xf32>, vector<128x128xf32>, vector<8x128xf32> -> vector<8x128xf32>
    %27 = vector.broadcast %4 : vector<1x128xf32> to vector<8x128xf32>
    %28 = arith.addf %26, %27 : vector<8x128xf32>
    %29 = arith.addf %28, %12 : vector<8x128xf32>
    %c0_19 = arith.constant 0 : index
    %c0_20 = arith.constant 0 : index
    %30 = vector.load %arg5[%c0_19, %c0_20] : memref<128x128xf32, #tpu.memory_space<vmem>>, vector<128x128xf32>
    %cst_21 = arith.constant dense<0.000000e+00> : vector<8x128xf32>
    %31 = tpu.matmul %29, %30, %cst_21 {dimension_numbers = #tpu.dot_dimension_numbers<[1], [0], [0], [1], [0, 0, 1, 1], [], []>} : vector<8x128xf32>, vector<128x128xf32>, vector<8x128xf32> -> vector<8x128xf32>
    %32 = vector.broadcast %5 : vector<1x128xf32> to vector<8x128xf32>
    %33 = arith.addf %31, %32 : vector<8x128xf32>
    %c0_22 = arith.constant 0 : index
    %c0_23 = arith.constant 0 : index
    %34 = vector.load %arg7[%c0_22, %c0_23] : memref<8x128xf32, #tpu.memory_space<vmem>>, vector<8x128xf32>
    tpu.vector_store %arg7[%c0_22, %c0_23], %33 {strides = array<i32>} : memref<8x128xf32, #tpu.memory_space<vmem>>, vector<8x128xf32>,
    return
  }
  func.func @transform_0(%arg0: i32) -> (i32, i32) {
    %c0_i32 = arith.constant 0 : i32
    %c0_i32_0 = arith.constant 0 : i32
    return %arg0, %c0_i32 : i32, i32
  }
  func.func @transform_1(%arg0: i32) -> (i32, i32) {
    %c0_i32 = arith.constant 0 : i32
    %c0_i32_0 = arith.constant 0 : i32
    %c0_i32_1 = arith.constant 0 : i32
    return %c0_i32, %c0_i32_0 : i32, i32
  }
  func.func @transform_2(%arg0: i32) -> (i32, i32) {
    %c0_i32 = arith.constant 0 : i32
    %c0_i32_0 = arith.constant 0 : i32
    %c0_i32_1 = arith.constant 0 : i32
    return %c0_i32, %c0_i32_0 : i32, i32
  }
  func.func @transform_3(%arg0: i32) -> (i32, i32) {
    %c0_i32 = arith.constant 0 : i32
    %c0_i32_0 = arith.constant 0 : i32
    %c0_i32_1 = arith.constant 0 : i32
    return %c0_i32, %c0_i32_0 : i32, i32
  }
  func.func @transform_4(%arg0: i32) -> (i32, i32) {
    %c0_i32 = arith.constant 0 : i32
    %c0_i32_0 = arith.constant 0 : i32
    %c0_i32_1 = arith.constant 0 : i32
    return %c0_i32, %c0_i32_0 : i32, i32
  }
  func.func @transform_5(%arg0: i32) -> (i32, i32) {
    %c0_i32 = arith.constant 0 : i32
    %c0_i32_0 = arith.constant 0 : i32
    %c0_i32_1 = arith.constant 0 : i32
    return %c0_i32, %c0_i32_0 : i32, i32
  }
  func.func @transform_6(%arg0: i32) -> (i32, i32) {
    %c0_i32 = arith.constant 0 : i32
    %c0_i32_0 = arith.constant 0 : i32
    return %arg0, %c0_i32 : i32, i32
  }
}

</mosaic_0001>

<llo_original>
// kernel: tpu_custom_call.1
$region0: #{tpu_custom_call.1}
  #allocation0 [shape = 'u32[]', space=smem, size = 0x4, offset = 0x4, fixed_abs, tag = 'smem constant byte address 0x4 - core index']
  #allocation1 [shape = 'u32[72,128]{1,0:T(1,128)}', space=vmem, size = 0x9000, scoped, tag = 'internal scratch']
  %s0 = inlined_call_operand.hbm [shape: f32[8,64], index: 0, kind: input, shape index: {}]
  %s1 = inlined_call_operand.hbm [shape: f32[64,128], index: 1, kind: input, shape index: {}]
  %s2 = inlined_call_operand.hbm [shape: f32[128,128], index: 2, kind: input, shape index: {}]
  %s3 = inlined_call_operand.hbm [shape: f32[128,128], index: 3, kind: input, shape index: {}]
  %s4 = inlined_call_operand.hbm [shape: f32[128,128], index: 4, kind: input, shape index: {}]
  %s5 = inlined_call_operand.hbm [shape: f32[8,128], index: 5, kind: input, shape index: {}]
  %s6 = inlined_call_operand.hbm [shape: f32[8,128], index: 6, kind: output, shape index: {}]
  %s7 = sld [smem:[#allocation0]]
  $region58: #{tpu_custom_call.1} parent=0
    _
  %s9 = ssub.s32 1, %s7
  %s10 = scalar_select 0, %s9, %s7
  $region1: #{tpu_custom_call.1} parent=0
    #allocation2 [shape = 'u8[4096]{0}', space=vmem, size = 0x1000, scoped, tag = 'input window, operand 0, single buffered']
    #allocation3 [shape = 's32[1]{0}', space=sflag, size = 0x4, scoped, tag = 'scoped memory for tpu_custom_call.1']
    #allocation4 [shape = 's32[1]{0}', space=sflag, size = 0x4, scoped, tag = 'scoped memory for tpu_custom_call.1']
    #allocation5 [shape = 'u8[32768]{0}', space=vmem, size = 0x8000, scoped, tag = 'input window, operand 1, single buffered']
    #allocation6 [shape = 's32[1]{0}', space=sflag, size = 0x4, scoped, tag = 'scoped memory for tpu_custom_call.1']
    #allocation7 [shape = 'u8[65536]{0}', space=vmem, size = 0x10000, scoped, tag = 'input window, operand 2, single buffered']
    #allocation8 [shape = 'u8[65536]{0}', space=vmem, size = 0x10000, scoped, tag = 'input window, operand 3, single buffered']
    #allocation9 [shape = 's32[1]{0}', space=sflag, size = 0x4, scoped, tag = 'scoped memory for tpu_custom_call.1']
    #allocation10 [shape = 'u8[65536]{0}', space=vmem, size = 0x10000, scoped, tag = 'input window, operand 4, single buffered']
    #allocation11 [shape = 'u8[4096]{0}', space=vmem, size = 0x1000, scoped, tag = 'input window, operand 5, single buffered']
    #allocation12 [shape = 's32[1]{0}', space=sflag, size = 0x4, scoped, tag = 'scoped memory for tpu_custom_call.1']
    #allocation13 [shape = 'u8[4096]{0}', space=vmem, size = 0x1000, scoped, tag = 'output window, operand 0, single buffered']
    %11 = vsyncpa [#allocation3], 0
    %12 = vsyncpa [#allocation6], 0
    %13 = vsyncpa [#allocation9], 0
    %14 = vsyncpa [#allocation12], 0
    %15 = vsyncpa [#allocation4], 0
    // Predicated region
    $region2: #{tpu_custom_call.1} parent=1 // pred_check
      _
    $region3: #{tpu_custom_call.1} parent=1 // pred_check_branch
      %17 = sbr.rel (0) target = $region5
    $region4: #{tpu_custom_call.1} parent=1 // pred_region
      %19 = vsyncadd [#allocation3], 0
      %s21 = sshll.u32 %s0, 4
      %s22 = int_to_ptr.hbm [resolvable:$true] %s21
      %s23 = sshll.u32 [#allocation2], 4
      %s24 = int_to_ptr.vmem [resolvable:$true] %s23
      %26 = dma.hbm_to_vmem [thread:$0]  %s22, 128, %s24, [#allocation3]
    $region5: #{tpu_custom_call.1} parent=1 // pred_fallthru
      _
    // Predicated region
    $region6: #{tpu_custom_call.1} parent=1 // pred_check
      _
    $region7: #{tpu_custom_call.1} parent=1 // pred_check_branch
      %28 = sbr.rel (0) target = $region9
    $region8: #{tpu_custom_call.1} parent=1 // pred_region
      %30 = vsyncadd [#allocation6], 0
      %s31 = sshll.u32 %s1, 4
      %s32 = int_to_ptr.hbm [resolvable:$true] %s31
      %s33 = sshll.u32 [#allocation5], 4
      %s34 = int_to_ptr.vmem [resolvable:$true] %s33
      %39 = dma.hbm_to_vmem [thread:$0]  %s32, 1024, %s34, [#allocation6], 128, 128, 8
    $region9: #{tpu_custom_call.1} parent=1 // pred_fallthru
      _
    // Predicated region
    $region10: #{tpu_custom_call.1} parent=1 // pred_check
      _
    $region11: #{tpu_custom_call.1} parent=1 // pred_check_branch
      %41 = sbr.rel (0) target = $region13
    $region12: #{tpu_custom_call.1} parent=1 // pred_region
      %43 = vsyncadd [#allocation6], 0
      %s44 = sshll.u32 %s2, 4
      %s45 = int_to_ptr.hbm [resolvable:$true] %s44
      %s46 = sshll.u32 [#allocation7], 4
      %s47 = int_to_ptr.vmem [resolvable:$true] %s46
      %52 = dma.hbm_to_vmem [thread:$0]  %s45, 2048, %s47, [#allocation6], 128, 128, 8
    $region13: #{tpu_custom_call.1} parent=1 // pred_fallthru
      _
    // Predicated region
    $region14: #{tpu_custom_call.1} parent=1 // pred_check
      _
    $region15: #{tpu_custom_call.1} parent=1 // pred_check_branch
      %54 = sbr.rel (0) target = $region17
    $region16: #{tpu_custom_call.1} parent=1 // pred_region
      %56 = vsyncadd [#allocation9], 0
      %s57 = sshll.u32 %s3, 4
      %s58 = int_to_ptr.hbm [resolvable:$true] %s57
      %s59 = sshll.u32 [#allocation8], 4
      %s60 = int_to_ptr.vmem [resolvable:$true] %s59
      %65 = dma.hbm_to_vmem [thread:$0]  %s58, 2048, %s60, [#allocation9], 128, 128, 8
    $region17: #{tpu_custom_call.1} parent=1 // pred_fallthru
      _
    // Predicated region
    $region18: #{tpu_custom_call.1} parent=1 // pred_check
      _
    $region19: #{tpu_custom_call.1} parent=1 // pred_check_branch
      %67 = sbr.rel (0) target = $region21
    $region20: #{tpu_custom_call.1} parent=1 // pred_region
      %69 = vsyncadd [#allocation9], 0
      %s70 = sshll.u32 %s4, 4
      %s71 = int_to_ptr.hbm [resolvable:$true] %s70
      %s72 = sshll.u32 [#allocation10], 4
      %s73 = int_to_ptr.vmem [resolvable:$true] %s72
      %78 = dma.hbm_to_vmem [thread:$0]  %s71, 2048, %s73, [#allocation9], 128, 128, 8
    $region21: #{tpu_custom_call.1} parent=1 // pred_fallthru
      _
    // Predicated region
    $region22: #{tpu_custom_call.1} parent=1 // pred_check
      _
    $region23: #{tpu_custom_call.1} parent=1 // pred_check_branch
      %80 = sbr.rel (0) target = $region25
    $region24: #{tpu_custom_call.1} parent=1 // pred_region
      %82 = vsyncadd [#allocation12], 0
      %s84 = sshll.u32 %s5, 4
      %s85 = int_to_ptr.hbm [resolvable:$true] %s84
      %s86 = sshll.u32 [#allocation11], 4
      %s87 = int_to_ptr.vmem [resolvable:$true] %s86
      %89 = dma.hbm_to_vmem [thread:$0]  %s85, 128, %s87, [#allocation12]
    $region25: #{tpu_custom_call.1} parent=1 // pred_fallthru
      _
    // Predicated region
    $region26: #{tpu_custom_call.1} parent=1 // pred_check
      _
    $region27: #{tpu_custom_call.1} parent=1 // pred_check_branch
      %91 = sbr.rel (0) target = $region29
    $region28: #{tpu_custom_call.1} parent=1 // pred_region
      %93 = dma.done [#allocation3], 128
    $region29: #{tpu_custom_call.1} parent=1 // pred_fallthru
      _
    // Predicated region
    $region30: #{tpu_custom_call.1} parent=1 // pred_check
      _
    $region31: #{tpu_custom_call.1} parent=1 // pred_check_branch
      %95 = sbr.rel (0) target = $region33
    $region32: #{tpu_custom_call.1} parent=1 // pred_region
      %97 = dma.done [#allocation6], 1024
    $region33: #{tpu_custom_call.1} parent=1 // pred_fallthru
      _
    // Predicated region
    $region34: #{tpu_custom_call.1} parent=1 // pred_check
      _
    $region35: #{tpu_custom_call.1} parent=1 // pred_check_branch
      %99 = sbr.rel (0) target = $region37
    $region36: #{tpu_custom_call.1} parent=1 // pred_region
      %101 = dma.done [#allocation6], 2048
    $region37: #{tpu_custom_call.1} parent=1 // pred_fallthru
      _
    // Predicated region
    $region38: #{tpu_custom_call.1} parent=1 // pred_check
      _
    $region39: #{tpu_custom_call.1} parent=1 // pred_check_branch
      %103 = sbr.rel (0) target = $region41
    $region40: #{tpu_custom_call.1} parent=1 // pred_region
      %105 = dma.done [#allocation9], 2048
    $region41: #{tpu_custom_call.1} parent=1 // pred_fallthru
      _
    // Predicated region
    $region42: #{tpu_custom_call.1} parent=1 // pred_check
      _
    $region43: #{tpu_custom_call.1} parent=1 // pred_check_branch
      %107 = sbr.rel (0) target = $region45
    $region44: #{tpu_custom_call.1} parent=1 // pred_region
      %109 = dma.done [#allocation9], 2048
    $region45: #{tpu_custom_call.1} parent=1 // pred_fallthru
      _
    // Predicated region
    $region46: #{tpu_custom_call.1} parent=1 // pred_check
      _
    $region47: #{tpu_custom_call.1} parent=1 // pred_check_branch
      %111 = sbr.rel (0) target = $region49
    $region48: #{tpu_custom_call.1} parent=1 // pred_region
      %113 = dma.done [#allocation12], 128
    $region49: #{tpu_custom_call.1} parent=1 // pred_fallthru
      _
    %v114 = vld [vmem:[#allocation11] sm:$0x1]
    %v115 = vld [vmem:[#allocation11 + $0x1] sm:$0x1]
    %v116 = vld [vmem:[#allocation11 + $0x2] sm:$0x1]
    %v117 = vld [vmem:[#allocation11 + $0x3] sm:$0x1]
    %v118 = vld [vmem:[#allocation11 + $0x4] sm:$0x1]
    %v119 = vld [vmem:[#allocation11 + $0x5] sm:$0x1]
    %v120 = vld [vmem:[#allocation2] sm:$0xff]
    %v121 = vld [vmem:[#allocation5] sm:$0xff]
    %v122 = vld [vmem:[#allocation5 + $0x8] sm:$0xff]
    %v123 = vld [vmem:[#allocation5 + $0x10] sm:$0xff]
    %v124 = vld [vmem:[#allocation5 + $0x18] sm:$0xff]
    %v125 = vld [vmem:[#allocation5 + $0x20] sm:$0xff]
    %v126 = vld [vmem:[#allocation5 + $0x28] sm:$0xff]
    %v127 = vld [vmem:[#allocation5 + $0x30] sm:$0xff]
    %v128 = vld [vmem:[#allocation5 + $0x38] sm:$0xff]
    %v129 = vperm.slane %v114, 0
    %vm130 = vcmask 523264
    %v132 = vsel %vm130, %v120, 0
    %134 = vmatpush.msra.mxu0 0.0
    %135 = vmatpush.msra.mxu0 0.0
    %136 = vmatpush.msra.mxu0 0.0
    %137 = vmatpush.msra.mxu0 0.0
    %138 = vmatpush.msra.mxu0 0.0
    %139 = vmatpush.msra.mxu0 0.0
    %140 = vmatpush.msra.mxu0 0.0
    %141 = vmatpush.msra.mxu0 0.0
    %142 = vmatpush.msra.mxu0 %v128
    %143 = vmatpush.msra.mxu0 %v127
    %144 = vmatpush.msra.mxu0 %v126
    %145 = vmatpush.msra.mxu0 %v125
    %146 = vmatpush.msra.mxu0 %v124
    %147 = vmatpush.msra.mxu0 %v123
    %148 = vmatpush.msra.mxu0 %v122
    %149 = vmatpush.msra.mxu0 %v121
    %150 = vmatmul.f32.gmra.mxu0 %v132
    %v151 = vpop.f32.mrf.mxu0
    %v152 = vadd.f32 %v129, %v151
    %153 = vdwg.mxu0
    %v154 = vmax.f32 %v152, 0.0
    %v155 = vperm.slane %v115, 0
    %v156 = vmul.f32 %v154, %v155
    %v157 = vperm.slane %v116, 0
    %v158 = vadd.f32 %v156, %v157
    %v159 = vmax.f32 %v158, 0.0
    %v160 = vld [vmem:[#allocation7] sm:$0xff]
    %v161 = vld [vmem:[#allocation7 + $0x8] sm:$0xff]
    %v162 = vld [vmem:[#allocation7 + $0x10] sm:$0xff]
    %v163 = vld [vmem:[#allocation7 + $0x18] sm:$0xff]
    %v164 = vld [vmem:[#allocation7 + $0x20] sm:$0xff]
    %v165 = vld [vmem:[#allocation7 + $0x28] sm:$0xff]
    %v166 = vld [vmem:[#allocation7 + $0x30] sm:$0xff]
    %v167 = vld [vmem:[#allocation7 + $0x38] sm:$0xff]
    %v168 = vld [vmem:[#allocation7 + $0x40] sm:$0xff]
    %v169 = vld [vmem:[#allocation7 + $0x48] sm:$0xff]
    %v170 = vld [vmem:[#allocation7 + $0x50] sm:$0xff]
    %v171 = vld [vmem:[#allocation7 + $0x58] sm:$0xff]
    %v172 = vld [vmem:[#allocation7 + $0x60] sm:$0xff]
    %v173 = vld [vmem:[#allocation7 + $0x68] sm:$0xff]
    %v174 = vld [vmem:[#allocation7 + $0x70] sm:$0xff]
    %v175 = vld [vmem:[#allocation7 + $0x78] sm:$0xff]
    %v176 = vperm.slane %v117, 0
    %177 = vmatpush.msra.mxu0 %v175
    %178 = vmatpush.msra.mxu0 %v174
    %179 = vmatpush.msra.mxu0 %v173
    %180 = vmatpush.msra.mxu0 %v172
    %181 = vmatpush.msra.mxu0 %v171
    %182 = vmatpush.msra.mxu0 %v170
    %183 = vmatpush.msra.mxu0 %v169
    %184 = vmatpush.msra.mxu0 %v168
    %185 = vmatpush.msra.mxu0 %v167
    %186 = vmatpush.msra.mxu0 %v166
    %187 = vmatpush.msra.mxu0 %v165
    %188 = vmatpush.msra.mxu0 %v164
    %189 = vmatpush.msra.mxu0 %v163
    %190 = vmatpush.msra.mxu0 %v162
    %191 = vmatpush.msra.mxu0 %v161
    %192 = vmatpush.msra.mxu0 %v160
    %193 = vmatmul.f32.gmra.mxu0 %v159
    %v194 = vpop.f32.mrf.mxu0
    %v195 = vadd.f32 %v176, %v194
    %196 = vdwg.mxu0
    %v197 = vmax.f32 %v195, 0.0
    %v198 = vld [vmem:[#allocation8] sm:$0xff]
    %v199 = vld [vmem:[#allocation8 + $0x8] sm:$0xff]
    %v200 = vld [vmem:[#allocation8 + $0x10] sm:$0xff]
    %v201 = vld [vmem:[#allocation8 + $0x18] sm:$0xff]
    %v202 = vld [vmem:[#allocation8 + $0x20] sm:$0xff]
    %v203 = vld [vmem:[#allocation8 + $0x28] sm:$0xff]
    %v204 = vld [vmem:[#allocation8 + $0x30] sm:$0xff]
    %v205 = vld [vmem:[#allocation8 + $0x38] sm:$0xff]
    %v206 = vld [vmem:[#allocation8 + $0x40] sm:$0xff]
    %v207 = vld [vmem:[#allocation8 + $0x48] sm:$0xff]
    %v208 = vld [vmem:[#allocation8 + $0x50] sm:$0xff]
    %v209 = vld [vmem:[#allocation8 + $0x58] sm:$0xff]
    %v210 = vld [vmem:[#allocation8 + $0x60] sm:$0xff]
    %v211 = vld [vmem:[#allocation8 + $0x68] sm:$0xff]
    %v212 = vld [vmem:[#allocation8 + $0x70] sm:$0xff]
    %v213 = vld [vmem:[#allocation8 + $0x78] sm:$0xff]
    %v214 = vperm.slane %v118, 0
    %215 = vmatpush.msra.mxu0 %v213
    %216 = vmatpush.msra.mxu0 %v212
    %217 = vmatpush.msra.mxu0 %v211
    %218 = vmatpush.msra.mxu0 %v210
    %219 = vmatpush.msra.mxu0 %v209
    %220 = vmatpush.msra.mxu0 %v208
    %221 = vmatpush.msra.mxu0 %v207
    %222 = vmatpush.msra.mxu0 %v206
    %223 = vmatpush.msra.mxu0 %v205
    %224 = vmatpush.msra.mxu0 %v204
    %225 = vmatpush.msra.mxu0 %v203
    %226 = vmatpush.msra.mxu0 %v202
    %227 = vmatpush.msra.mxu0 %v201
    %228 = vmatpush.msra.mxu0 %v200
    %229 = vmatpush.msra.mxu0 %v199
    %230 = vmatpush.msra.mxu0 %v198
    %231 = vmatmul.f32.gmra.mxu0 %v197
    %v232 = vpop.f32.mrf.mxu0
    %v233 = vadd.f32 %v214, %v232
    %234 = vdwg.mxu0
    %v235 = vadd.f32 %v233, %v154
    %v236 = vld [vmem:[#allocation10] sm:$0xff]
    %v237 = vld [vmem:[#allocation10 + $0x8] sm:$0xff]
    %v238 = vld [vmem:[#allocation10 + $0x10] sm:$0xff]
    %v239 = vld [vmem:[#allocation10 + $0x18] sm:$0xff]
    %v240 = vld [vmem:[#allocation10 + $0x20] sm:$0xff]
    %v241 = vld [vmem:[#allocation10 + $0x28] sm:$0xff]
    %v242 = vld [vmem:[#allocation10 + $0x30] sm:$0xff]
    %v243 = vld [vmem:[#allocation10 + $0x38] sm:$0xff]
    %v244 = vld [vmem:[#allocation10 + $0x40] sm:$0xff]
    %v245 = vld [vmem:[#allocation10 + $0x48] sm:$0xff]
    %v246 = vld [vmem:[#allocation10 + $0x50] sm:$0xff]
    %v247 = vld [vmem:[#allocation10 + $0x58] sm:$0xff]
    %v248 = vld [vmem:[#allocation10 + $0x60] sm:$0xff]
    %v249 = vld [vmem:[#allocation10 + $0x68] sm:$0xff]
    %v250 = vld [vmem:[#allocation10 + $0x70] sm:$0xff]
    %v251 = vld [vmem:[#allocation10 + $0x78] sm:$0xff]
    %v252 = vperm.slane %v119, 0
    %253 = vmatpush.msra.mxu0 %v251
    %254 = vmatpush.msra.mxu0 %v250
    %255 = vmatpush.msra.mxu0 %v249
    %256 = vmatpush.msra.mxu0 %v248
    %257 = vmatpush.msra.mxu0 %v247
    %258 = vmatpush.msra.mxu0 %v246
    %259 = vmatpush.msra.mxu0 %v245
    %260 = vmatpush.msra.mxu0 %v244
    %261 = vmatpush.msra.mxu0 %v243
    %262 = vmatpush.msra.mxu0 %v242
    %263 = vmatpush.msra.mxu0 %v241
    %264 = vmatpush.msra.mxu0 %v240
    %265 = vmatpush.msra.mxu0 %v239
    %266 = vmatpush.msra.mxu0 %v238
    %267 = vmatpush.msra.mxu0 %v237
    %268 = vmatpush.msra.mxu0 %v236
    %269 = vmatmul.f32.gmra.mxu0 %v235
    %v270 = vpop.f32.mrf.mxu0
    %v271 = vadd.f32 %v252, %v270
    %272 = vdwg.mxu0
    %273 = vst [vmem:[#allocation13] sm:$0xff] %v271
    // Predicated region
    $region50: #{tpu_custom_call.1} parent=1 // pred_check
      _
    $region51: #{tpu_custom_call.1} parent=1 // pred_check_branch
      %275 = sbr.rel (0) target = $region53
    $region52: #{tpu_custom_call.1} parent=1 // pred_region
      %277 = vsyncadd [#allocation4], 0
      %s279 = sshll.u32 [#allocation13], 4
      %s280 = int_to_ptr.vmem [resolvable:$true] %s279
      %s281 = sshll.u32 %s6, 4
      %s282 = int_to_ptr.hbm [resolvable:$true] %s281
      %284 = dma.vmem_to_hbm [thread:$0]  %s280, 128, %s282, [#allocation4]
    $region53: #{tpu_custom_call.1} parent=1 // pred_fallthru
      _
    // Predicated region
    $region54: #{tpu_custom_call.1} parent=1 // pred_check
      _
    $region55: #{tpu_custom_call.1} parent=1 // pred_check_branch
      %286 = sbr.rel (0) target = $region57
    $region56: #{tpu_custom_call.1} parent=1 // pred_region
      %288 = dma.done [#allocation4], 128
    $region57: #{tpu_custom_call.1} parent=1 // pred_fallthru
      _
    %289 = vsyncpa [#allocation3], 1
    %290 = vsyncpa [#allocation6], 1
    %291 = vsyncpa [#allocation9], 1
    %292 = vsyncpa [#allocation12], 1
    %293 = vsyncpa [#allocation4], 1

// kernel: tpu_custom_call.1
$region0: #{tpu_custom_call.1}
  #allocation0 [shape = 'u32[]', space=smem, size = 0x4, offset = 0x4, fixed_abs, tag = 'smem constant byte address 0x4 - core index']
  #allocation1 [shape = 'u32[72,128]{1,0:T(1,128)}', space=vmem, size = 0x9000, scoped, tag = 'internal scratch']
  %s0 = inlined_call_operand.hbm [shape: f32[8,64], index: 0, kind: input, shape index: {}]
  %s1 = inlined_call_operand.hbm [shape: f32[64,128], index: 1, kind: input, shape index: {}]
  %s2 = inlined_call_operand.hbm [shape: f32[128,128], index: 2, kind: input, shape index: {}]
  %s3 = inlined_call_operand.hbm [shape: f32[128,128], index: 3, kind: input, shape index: {}]
  %s4 = inlined_call_operand.hbm [shape: f32[128,128], index: 4, kind: input, shape index: {}]
  %s5 = inlined_call_operand.hbm [shape: f32[8,128], index: 5, kind: input, shape index: {}]
  %s6 = inlined_call_operand.hbm [shape: f32[8,128], index: 6, kind: output, shape index: {}]
  %s7 = sld [smem:[#allocation0]]
  $region58: #{tpu_custom_call.1} parent=0
    _
  %s9 = ssub.s32 1, %s7
  %s10 = scalar_select 0, %s9, %s7
  $region1: #{tpu_custom_call.1} parent=0
    #allocation2 [shape = 'u8[4096]{0}', space=vmem, size = 0x1000, scoped, tag = 'input window, operand 0, single buffered']
    #allocation3 [shape = 's32[1]{0}', space=sflag, size = 0x4, scoped, tag = 'scoped memory for tpu_custom_call.1']
    #allocation4 [shape = 's32[1]{0}', space=sflag, size = 0x4, scoped, tag = 'scoped memory for tpu_custom_call.1']
    #allocation5 [shape = 'u8[32768]{0}', space=vmem, size = 0x8000, scoped, tag = 'input window, operand 1, single buffered']
    #allocation6 [shape = 's32[1]{0}', space=sflag, size = 0x4, scoped, tag = 'scoped memory for tpu_custom_call.1']
    #allocation7 [shape = 'u8[65536]{0}', space=vmem, size = 0x10000, scoped, tag = 'input window, operand 2, single buffered']
    #allocation8 [shape = 'u8[65536]{0}', space=vmem, size = 0x10000, scoped, tag = 'input window, operand 3, single buffered']
    #allocation9 [shape = 's32[1]{0}', space=sflag, size = 0x4, scoped, tag = 'scoped memory for tpu_custom_call.1']
    #allocation10 [shape = 'u8[65536]{0}', space=vmem, size = 0x10000, scoped, tag = 'input window, operand 4, single buffered']
    #allocation11 [shape = 'u8[4096]{0}', space=vmem, size = 0x1000, scoped, tag = 'input window, operand 5, single buffered']
    #allocation12 [shape = 's32[1]{0}', space=sflag, size = 0x4, scoped, tag = 'scoped memory for tpu_custom_call.1']
    #allocation13 [shape = 'u8[4096]{0}', space=vmem, size = 0x1000, scoped, tag = 'output window, operand 0, single buffered']
    %11 = vsyncpa [#allocation3], 0
    %12 = vsyncpa [#allocation6], 0
    %13 = vsyncpa [#allocation9], 0
    %14 = vsyncpa [#allocation12], 0
    %15 = vsyncpa [#allocation4], 0
    // Predicated region
    $region2: #{tpu_custom_call.1} parent=1 // pred_check
      _
    $region3: #{tpu_custom_call.1} parent=1 // pred_check_branch
      %17 = sbr.rel (0) target = $region5
    $region4: #{tpu_custom_call.1} parent=1 // pred_region
      %19 = vsyncadd [#allocation3], 0
      %s21 = sshll.u32 %s0, 4
      %s22 = int_to_ptr.hbm [resolvable:$true] %s21
      %s23 = sshll.u32 [#allocation2], 4
      %s24 = int_to_ptr.vmem [resolvable:$true] %s23
      %26 = dma.hbm_to_vmem [thread:$0]  %s22, 128, %s24, [#allocation3]
    $region5: #{tpu_custom_call.1} parent=1 // pred_fallthru
      _
    // Predicated region
    $region6: #{tpu_custom_call.1} parent=1 // pred_check
      _
    $region7: #{tpu_custom_call.1} parent=1 // pred_check_branch
      %28 = sbr.rel (0) target = $region9
    $region8: #{tpu_custom_call.1} parent=1 // pred_region
      %30 = vsyncadd [#allocation6], 0
      %s31 = sshll.u32 %s1, 4
      %s32 = int_to_ptr.hbm [resolvable:$true] %s31
      %s33 = sshll.u32 [#allocation5], 4
      %s34 = int_to_ptr.vmem [resolvable:$true] %s33
      %39 = dma.hbm_to_vmem [thread:$0]  %s32, 1024, %s34, [#allocation6], 128, 128, 8
    $region9: #{tpu_custom_call.1} parent=1 // pred_fallthru
      _
    // Predicated region
    $region10: #{tpu_custom_call.1} parent=1 // pred_check
      _
    $region11: #{tpu_custom_call.1} parent=1 // pred_check_branch
      %41 = sbr.rel (0) target = $region13
    $region12: #{tpu_custom_call.1} parent=1 // pred_region
      %43 = vsyncadd [#allocation6], 0
      %s44 = sshll.u32 %s2, 4
      %s45 = int_to_ptr.hbm [resolvable:$true] %s44
      %s46 = sshll.u32 [#allocation7], 4
      %s47 = int_to_ptr.vmem [resolvable:$true] %s46
      %52 = dma.hbm_to_vmem [thread:$0]  %s45, 2048, %s47, [#allocation6], 128, 128, 8
    $region13: #{tpu_custom_call.1} parent=1 // pred_fallthru
      _
    // Predicated region
    $region14: #{tpu_custom_call.1} parent=1 // pred_check
      _
    $region15: #{tpu_custom_call.1} parent=1 // pred_check_branch
      %54 = sbr.rel (0) target = $region17
    $region16: #{tpu_custom_call.1} parent=1 // pred_region
      %56 = vsyncadd [#allocation9], 0
      %s57 = sshll.u32 %s3, 4
      %s58 = int_to_ptr.hbm [resolvable:$true] %s57
      %s59 = sshll.u32 [#allocation8], 4
      %s60 = int_to_ptr.vmem [resolvable:$true] %s59
      %65 = dma.hbm_to_vmem [thread:$0]  %s58, 2048, %s60, [#allocation9], 128, 128, 8
    $region17: #{tpu_custom_call.1} parent=1 // pred_fallthru
      _
    // Predicated region
    $region18: #{tpu_custom_call.1} parent=1 // pred_check
      _
    $region19: #{tpu_custom_call.1} parent=1 // pred_check_branch
      %67 = sbr.rel (0) target = $region21
    $region20: #{tpu_custom_call.1} parent=1 // pred_region
      %69 = vsyncadd [#allocation9], 0
      %s70 = sshll.u32 %s4, 4
      %s71 = int_to_ptr.hbm [resolvable:$true] %s70
      %s72 = sshll.u32 [#allocation10], 4
      %s73 = int_to_ptr.vmem [resolvable:$true] %s72
      %78 = dma.hbm_to_vmem [thread:$0]  %s71, 2048, %s73, [#allocation9], 128, 128, 8
    $region21: #{tpu_custom_call.1} parent=1 // pred_fallthru
      _
    // Predicated region
    $region22: #{tpu_custom_call.1} parent=1 // pred_check
      _
    $region23: #{tpu_custom_call.1} parent=1 // pred_check_branch
      %80 = sbr.rel (0) target = $region25
    $region24: #{tpu_custom_call.1} parent=1 // pred_region
      %82 = vsyncadd [#allocation12], 0
      %s84 = sshll.u32 %s5, 4
      %s85 = int_to_ptr.hbm [resolvable:$true] %s84
      %s86 = sshll.u32 [#allocation11], 4
      %s87 = int_to_ptr.vmem [resolvable:$true] %s86
      %89 = dma.hbm_to_vmem [thread:$0]  %s85, 128, %s87, [#allocation12]
    $region25: #{tpu_custom_call.1} parent=1 // pred_fallthru
      _
    // Predicated region
    $region26: #{tpu_custom_call.1} parent=1 // pred_check
      _
    $region27: #{tpu_custom_call.1} parent=1 // pred_check_branch
      %91 = sbr.rel (0) target = $region29
    $region28: #{tpu_custom_call.1} parent=1 // pred_region
      %93 = dma.done [#allocation3], 128
    $region29: #{tpu_custom_call.1} parent=1 // pred_fallthru
      _
    // Predicated region
    $region30: #{tpu_custom_call.1} parent=1 // pred_check
      _
    $region31: #{tpu_custom_call.1} parent=1 // pred_check_branch
      %95 = sbr.rel (0) target = $region33
    $region32: #{tpu_custom_call.1} parent=1 // pred_region
      %97 = dma.done [#allocation6], 1024
    $region33: #{tpu_custom_call.1} parent=1 // pred_fallthru
      _
    // Predicated region
    $region34: #{tpu_custom_call.1} parent=1 // pred_check
      _
    $region35: #{tpu_custom_call.1} parent=1 // pred_check_branch
      %99 = sbr.rel (0) target = $region37
    $region36: #{tpu_custom_call.1} parent=1 // pred_region
      %101 = dma.done [#allocation6], 2048
    $region37: #{tpu_custom_call.1} parent=1 // pred_fallthru
      _
    // Predicated region
    $region38: #{tpu_custom_call.1} parent=1 // pred_check
      _
    $region39: #{tpu_custom_call.1} parent=1 // pred_check_branch
      %103 = sbr.rel (0) target = $region41
    $region40: #{tpu_custom_call.1} parent=1 // pred_region
      %105 = dma.done [#allocation9], 2048
    $region41: #{tpu_custom_call.1} parent=1 // pred_fallthru
      _
    // Predicated region
    $region42: #{tpu_custom_call.1} parent=1 // pred_check
      _
    $region43: #{tpu_custom_call.1} parent=1 // pred_check_branch
      %107 = sbr.rel (0) target = $region45
    $region44: #{tpu_custom_call.1} parent=1 // pred_region
      %109 = dma.done [#allocation9], 2048
    $region45: #{tpu_custom_call.1} parent=1 // pred_fallthru
      _
    // Predicated region
    $region46: #{tpu_custom_call.1} parent=1 // pred_check
      _
    $region47: #{tpu_custom_call.1} parent=1 // pred_check_branch
      %111 = sbr.rel (0) target = $region49
    $region48: #{tpu_custom_call.1} parent=1 // pred_region
      %113 = dma.done [#allocation12], 128
    $region49: #{tpu_custom_call.1} parent=1 // pred_fallthru
      _
    %v114 = vld [vmem:[#allocation11] sm:$0x1]
    %v115 = vld [vmem:[#allocation11 + $0x1] sm:$0x1]
    %v116 = vld [vmem:[#allocation11 + $0x2] sm:$0x1]
    %v117 = vld [vmem:[#allocation11 + $0x3] sm:$0x1]
    %v118 = vld [vmem:[#allocation11 + $0x4] sm:$0x1]
    %v119 = vld [vmem:[#allocation11 + $0x5] sm:$0x1]
    %v120 = vld [vmem:[#allocation2] sm:$0xff]
    %v121 = vld [vmem:[#allocation5] sm:$0xff]
    %v122 = vld [vmem:[#allocation5 + $0x8] sm:$0xff]
    %v123 = vld [vmem:[#allocation5 + $0x10] sm:$0xff]
    %v124 = vld [vmem:[#allocation5 + $0x18] sm:$0xff]
    %v125 = vld [vmem:[#allocation5 + $0x20] sm:$0xff]
    %v126 = vld [vmem:[#allocation5 + $0x28] sm:$0xff]
    %v127 = vld [vmem:[#allocation5 + $0x30] sm:$0xff]
    %v128 = vld [vmem:[#allocation5 + $0x38] sm:$0xff]
    %v129 = vperm.slane %v114, 0
    %vm130 = vcmask 523264
    %v132 = vsel %vm130, %v120, 0
    %134 = vmatpush.msra.mxu0 0.0
    %135 = vmatpush.msra.mxu0 0.0
    %136 = vmatpush.msra.mxu0 0.0
    %137 = vmatpush.msra.mxu0 0.0
    %138 = vmatpush.msra.mxu0 0.0
    %139 = vmatpush.msra.mxu0 0.0
    %140 = vmatpush.msra.mxu0 0.0
    %141 = vmatpush.msra.mxu0 0.0
    %142 = vmatpush.msra.mxu0 %v128
    %143 = vmatpush.msra.mxu0 %v127
    %144 = vmatpush.msra.mxu0 %v126
    %145 = vmatpush.msra.mxu0 %v125
    %146 = vmatpush.msra.mxu0 %v124
    %147 = vmatpush.msra.mxu0 %v123
    %148 = vmatpush.msra.mxu0 %v122
    %149 = vmatpush.msra.mxu0 %v121
    %150 = vmatmul.f32.gmra.mxu0 %v132
    %v151 = vpop.f32.mrf.mxu0
    %v152 = vadd.f32 %v129, %v151
    %153 = vdwg.mxu0
    %v154 = vmax.f32 %v152, 0.0
    %v155 = vperm.slane %v115, 0
    %v156 = vmul.f32 %v154, %v155
    %v157 = vperm.slane %v116, 0
    %v158 = vadd.f32 %v156, %v157
    %v159 = vmax.f32 %v158, 0.0
    %v160 = vld [vmem:[#allocation7] sm:$0xff]
    %v161 = vld [vmem:[#allocation7 + $0x8] sm:$0xff]
    %v162 = vld [vmem:[#allocation7 + $0x10] sm:$0xff]
    %v163 = vld [vmem:[#allocation7 + $0x18] sm:$0xff]
    %v164 = vld [vmem:[#allocation7 + $0x20] sm:$0xff]
    %v165 = vld [vmem:[#allocation7 + $0x28] sm:$0xff]
    %v166 = vld [vmem:[#allocation7 + $0x30] sm:$0xff]
    %v167 = vld [vmem:[#allocation7 + $0x38] sm:$0xff]
    %v168 = vld [vmem:[#allocation7 + $0x40] sm:$0xff]
    %v169 = vld [vmem:[#allocation7 + $0x48] sm:$0xff]
    %v170 = vld [vmem:[#allocation7 + $0x50] sm:$0xff]
    %v171 = vld [vmem:[#allocation7 + $0x58] sm:$0xff]
    %v172 = vld [vmem:[#allocation7 + $0x60] sm:$0xff]
    %v173 = vld [vmem:[#allocation7 + $0x68] sm:$0xff]
    %v174 = vld [vmem:[#allocation7 + $0x70] sm:$0xff]
    %v175 = vld [vmem:[#allocation7 + $0x78] sm:$0xff]
    %v176 = vperm.slane %v117, 0
    %177 = vmatpush.msra.mxu0 %v175
    %178 = vmatpush.msra.mxu0 %v174
    %179 = vmatpush.msra.mxu0 %v173
    %180 = vmatpush.msra.mxu0 %v172
    %181 = vmatpush.msra.mxu0 %v171
    %182 = vmatpush.msra.mxu0 %v170
    %183 = vmatpush.msra.mxu0 %v169
    %184 = vmatpush.msra.mxu0 %v168
    %185 = vmatpush.msra.mxu0 %v167
    %186 = vmatpush.msra.mxu0 %v166
    %187 = vmatpush.msra.mxu0 %v165
    %188 = vmatpush.msra.mxu0 %v164
    %189 = vmatpush.msra.mxu0 %v163
    %190 = vmatpush.msra.mxu0 %v162
    %191 = vmatpush.msra.mxu0 %v161
    %192 = vmatpush.msra.mxu0 %v160
    %193 = vmatmul.f32.gmra.mxu0 %v159
    %v194 = vpop.f32.mrf.mxu0
    %v195 = vadd.f32 %v176, %v194
    %196 = vdwg.mxu0
    %v197 = vmax.f32 %v195, 0.0
    %v198 = vld [vmem:[#allocation8] sm:$0xff]
    %v199 = vld [vmem:[#allocation8 + $0x8] sm:$0xff]
    %v200 = vld [vmem:[#allocation8 + $0x10] sm:$0xff]
    %v201 = vld [vmem:[#allocation8 + $0x18] sm:$0xff]
    %v202 = vld [vmem:[#allocation8 + $0x20] sm:$0xff]
    %v203 = vld [vmem:[#allocation8 + $0x28] sm:$0xff]
    %v204 = vld [vmem:[#allocation8 + $0x30] sm:$0xff]
    %v205 = vld [vmem:[#allocation8 + $0x38] sm:$0xff]
    %v206 = vld [vmem:[#allocation8 + $0x40] sm:$0xff]
    %v207 = vld [vmem:[#allocation8 + $0x48] sm:$0xff]
    %v208 = vld [vmem:[#allocation8 + $0x50] sm:$0xff]
    %v209 = vld [vmem:[#allocation8 + $0x58] sm:$0xff]
    %v210 = vld [vmem:[#allocation8 + $0x60] sm:$0xff]
    %v211 = vld [vmem:[#allocation8 + $0x68] sm:$0xff]
    %v212 = vld [vmem:[#allocation8 + $0x70] sm:$0xff]
    %v213 = vld [vmem:[#allocation8 + $0x78] sm:$0xff]
    %v214 = vperm.slane %v118, 0
    %215 = vmatpush.msra.mxu0 %v213
    %216 = vmatpush.msra.mxu0 %v212
    %217 = vmatpush.msra.mxu0 %v211
    %218 = vmatpush.msra.mxu0 %v210
    %219 = vmatpush.msra.mxu0 %v209
    %220 = vmatpush.msra.mxu0 %v208
    %221 = vmatpush.msra.mxu0 %v207
    %222 = vmatpush.msra.mxu0 %v206
    %223 = vmatpush.msra.mxu0 %v205
    %224 = vmatpush.msra.mxu0 %v204
    %225 = vmatpush.msra.mxu0 %v203
    %226 = vmatpush.msra.mxu0 %v202
    %227 = vmatpush.msra.mxu0 %v201
    %228 = vmatpush.msra.mxu0 %v200
    %229 = vmatpush.msra.mxu0 %v199
    %230 = vmatpush.msra.mxu0 %v198
    %231 = vmatmul.f32.gmra.mxu0 %v197
    %v232 = vpop.f32.mrf.mxu0
    %v233 = vadd.f32 %v214, %v232
    %234 = vdwg.mxu0
    %v235 = vadd.f32 %v233, %v154
    %v236 = vld [vmem:[#allocation10] sm:$0xff]
    %v237 = vld [vmem:[#allocation10 + $0x8] sm:$0xff]
    %v238 = vld [vmem:[#allocation10 + $0x10] sm:$0xff]
    %v239 = vld [vmem:[#allocation10 + $0x18] sm:$0xff]
    %v240 = vld [vmem:[#allocation10 + $0x20] sm:$0xff]
    %v241 = vld [vmem:[#allocation10 + $0x28] sm:$0xff]
    %v242 = vld [vmem:[#allocation10 + $0x30] sm:$0xff]
    %v243 = vld [vmem:[#allocation10 + $0x38] sm:$0xff]
    %v244 = vld [vmem:[#allocation10 + $0x40] sm:$0xff]
    %v245 = vld [vmem:[#allocation10 + $0x48] sm:$0xff]
    %v246 = vld [vmem:[#allocation10 + $0x50] sm:$0xff]
    %v247 = vld [vmem:[#allocation10 + $0x58] sm:$0xff]
    %v248 = vld [vmem:[#allocation10 + $0x60] sm:$0xff]
    %v249 = vld [vmem:[#allocation10 + $0x68] sm:$0xff]
    %v250 = vld [vmem:[#allocation10 + $0x70] sm:$0xff]
    %v251 = vld [vmem:[#allocation10 + $0x78] sm:$0xff]
    %v252 = vperm.slane %v119, 0
    %253 = vmatpush.msra.mxu0 %v251
    %254 = vmatpush.msra.mxu0 %v250
    %255 = vmatpush.msra.mxu0 %v249
    %256 = vmatpush.msra.mxu0 %v248
    %257 = vmatpush.msra.mxu0 %v247
    %258 = vmatpush.msra.mxu0 %v246
    %259 = vmatpush.msra.mxu0 %v245
    %260 = vmatpush.msra.mxu0 %v244
    %261 = vmatpush.msra.mxu0 %v243
    %262 = vmatpush.msra.mxu0 %v242
    %263 = vmatpush.msra.mxu0 %v241
    %264 = vmatpush.msra.mxu0 %v240
    %265 = vmatpush.msra.mxu0 %v239
    %266 = vmatpush.msra.mxu0 %v238
    %267 = vmatpush.msra.mxu0 %v237
    %268 = vmatpush.msra.mxu0 %v236
    %269 = vmatmul.f32.gmra.mxu0 %v235
    %v270 = vpop.f32.mrf.mxu0
    %v271 = vadd.f32 %v252, %v270
    %272 = vdwg.mxu0
    %273 = vst [vmem:[#allocation13] sm:$0xff] %v271
    // Predicated region
    $region50: #{tpu_custom_call.1} parent=1 // pred_check
      _
    $region51: #{tpu_custom_call.1} parent=1 // pred_check_branch
      %275 = sbr.rel (0) target = $region53
    $region52: #{tpu_custom_call.1} parent=1 // pred_region
      %277 = vsyncadd [#allocation4], 0
      %s279 = sshll.u32 [#allocation13], 4
      %s280 = int_to_ptr.vmem [resolvable:$true] %s279
      %s281 = sshll.u32 %s6, 4
      %s282 = int_to_ptr.hbm [resolvable:$true] %s281
      %284 = dma.vmem_to_hbm [thread:$0]  %s280, 128, %s282, [#allocation4]
    $region53: #{tpu_custom_call.1} parent=1 // pred_fallthru
      _
    // Predicated region
    $region54: #{tpu_custom_call.1} parent=1 // pred_check
      _
    $region55: #{tpu_custom_call.1} parent=1 // pred_check_branch
      %286 = sbr.rel (0) target = $region57
    $region56: #{tpu_custom_call.1} parent=1 // pred_region
      %288 = dma.done [#allocation4], 128
    $region57: #{tpu_custom_call.1} parent=1 // pred_fallthru
      _
    %289 = vsyncpa [#allocation3], 1
    %290 = vsyncpa [#allocation6], 1
    %291 = vsyncpa [#allocation9], 1
    %292 = vsyncpa [#allocation12], 1
    %293 = vsyncpa [#allocation4], 1

</llo_original>
